<compile_context>
chip_gen: v7x
topology: tpu7x:2x2x1
jax: 0.10.0
libtpu: 0.0.40
codegen_flags: <defaults>
</compile_context>

<pallas_src>
import jax
import jax.numpy as jnp
import numpy as np
from jax.experimental import pallas as pl
from jax.experimental.pallas import tpu as pltpu


def _round_up(v, m):
    return (v + m - 1) // m * m


def _unshuffle_kernel(x_ref, p_ref, o_ref):
    # x_ref: (1, s, s, od_blk, oh, ow)    dims (a=1, b, c, p, q, r)
    # p_ref: (s*s*ow, s*s*ow)             one-hot permutation: K=(b,c,r) -> N=(b,r,c)
    # o_ref: (od_blk, 1, oh, s*s*ow)      dims (p, a=1, q, [b,r,c])
    s = x_ref.shape[1]
    od_blk, oh, ow = x_ref.shape[3], x_ref.shape[4], x_ref.shape[5]
    m = od_blk * oh
    n = o_ref.shape[-1]

    # Build the matmul LHS: (od_blk*oh, s^2*ow), K ordered (b, c, r) to match p_ref.
    # (oh % 8 == 0 makes the (od_blk, oh) -> (od_blk*oh) collapse a free sublane relayout.)
    lhs = jnp.concatenate(
        [x_ref[0, b, c].reshape(m, ow) for b in range(s) for c in range(s)],
        axis=-1,
    )
    if lhs.dtype != p_ref.dtype:
        lhs = lhs.astype(p_ref.dtype)     # non-float inputs go through f32

    prec = (jax.lax.Precision.HIGHEST
            if p_ref.dtype == jnp.dtype(jnp.float32)
            else jax.lax.Precision.DEFAULT)
    res = jnp.dot(lhs, p_ref[...],
                  preferred_element_type=jnp.float32, precision=prec)

    o_ref[...] = res.reshape(od_blk, 1, oh, n).astype(o_ref.dtype)


def _vmem_budgets():
    """(block_budget_bytes, vmem_limit_bytes) tuned per TPU generation."""
    kind = ""
    try:
        kind = jax.devices()[0].device_kind.lower()
    except Exception:
        pass
    if "v7" in kind:
        return 14 * 2**20, 48 * 2**20        # v7x: 64 MiB per-TC physical VMEM
    if "v5" in kind or "v6" in kind:
        return 28 * 2**20, 100 * 2**20       # v5e/v6e: 128 MiB physical VMEM
    return 14 * 2**20, 48 * 2**20            # unknown: conservative


def _pick_od_block(od, s, oh, ow, sK, itemsize, budget_bytes):
    # Per od-row VMEM bytes (padded to the (8,128) vreg tiling), including double
    # buffering of the in/out blocks and the in-kernel f32 intermediates.
    oh8 = _round_up(oh, 8)
    in_row = (s * s) * oh8 * _round_up(ow, 128) * itemsize
    out_row = oh8 * _round_up(sK, 128) * itemsize
    work_row = 2 * oh8 * _round_up(sK, 128) * 4          # lhs concat + matmul result
    per_row = 2 * (in_row + out_row) + work_row
    blk = max(1, min(od, budget_bytes // max(per_row, 1)))
    while od % blk:                   # largest divisor of od that fits the budget
        blk -= 1
    return blk


def pixel_unshuffle_3d(x, scale, *, block_budget_bytes=None, vmem_limit_bytes=None):
    """Exact equivalent of PixelUnShuffle3d.forward for NCDHW input."""
    B, C, D, H, Wi = x.shape
    s = int(scale)
    assert D % s == 0 and H % s == 0 and Wi % s == 0
    od, oh, ow = D // s, H // s, Wi // s
    BC = B * C
    sK = s * s * ow                     # fused K = N = lane-dense interleave dim (b,r,c)
    itemsize = jnp.dtype(x.dtype).itemsize

    def_budget, def_limit = _vmem_budgets()
    if block_budget_bytes is None:
        block_budget_bytes = def_budget
    if vmem_limit_bytes is None:
        vmem_limit_bytes = def_limit

    od_blk = _pick_od_block(od, s, oh, ow, sK, itemsize, block_budget_bytes)
    n_chunks = od // od_blk

    # Free metadata reshape (row-major reinterpretation of the contiguous DHW axis).
    x7 = x.reshape(BC, s, s, s, od, oh, ow)

    # Host-precomputed 0/1 permutation matrix: P[b*s*ow + c*ow + r, b*s*ow + r*s + c] = 1.
    mm_dtype = x.dtype if jnp.issubdtype(jnp.dtype(x.dtype), jnp.floating) else jnp.float32
    k = np.arange(sK)
    b_i, c_i, r_i = k // (s * ow), (k // ow) % s, k % ow
    perm_np = np.zeros((sK, sK), dtype=np.float32)
    perm_np[k, b_i * (s * ow) + r_i * s + c_i] = 1.0
    perm = jnp.asarray(perm_np, dtype=mm_dtype)

    out = pl.pallas_call(
        _unshuffle_kernel,
        out_shape=jax.ShapeDtypeStruct((BC, od, s, oh, sK), x.dtype),
        grid=(BC, s, n_chunks),
        in_specs=[
            pl.BlockSpec(
                (None, 1, s, s, od_blk, oh, ow),
                lambda g, a, pc: (g, a, 0, 0, pc, 0, 0),
            ),
            pl.BlockSpec((sK, sK), lambda g, a, pc: (0, 0)),   # resident constant
        ],
        out_specs=pl.BlockSpec(
            (None, od_blk, 1, oh, sK),
            lambda g, a, pc: (g, pc, a, 0, 0),
        ),
        compiler_params=pltpu.CompilerParams(
            dimension_semantics=("parallel", "parallel", "parallel"),
            vmem_limit_bytes=vmem_limit_bytes,
        ),
        cost_estimate=pl.CostEstimate(
            flops=2 * BC * s * od * oh * sK * sK,
            transcendentals=0,
            bytes_accessed=2 * x.size * itemsize + sK * sK * itemsize,
        ),
    )(x7, perm)

    # Free metadata reshape to the module's output shape.
    return out.reshape(B, C * s ** 3, od, oh, ow)


def _reference(x, s):
    """Pure-JAX reference: literal transcription of the PyTorch forward."""
    B, C, D, H, W = x.shape
    od, oh, ow = D // s, H // s, W // s
    v = x.reshape(B, C, s, s, s, od, oh, ow)
    p = jnp.transpose(v, (0, 1, 5, 2, 6, 3, 7, 4))
    return p.reshape(B, C * s ** 3, od, oh, ow)


if __name__ == "__main__":
    scale = 2
    B, C, D, H, W = 2, 3, 16, 16, 16  # small NCDHW example

    key = jax.random.PRNGKey(0)
    x = jax.random.normal(key, (B, C, D, H, W), dtype=jnp.float32)

    y = jax.block_until_ready(pixel_unshuffle_3d(x, scale))
    y_ref = jax.block_until_ready(_reference(x, scale))

    assert y.shape == (B, C * scale ** 3, D // scale, H // scale, W // scale), y.shape
    np.testing.assert_allclose(np.asarray(y), np.asarray(y_ref), rtol=0, atol=0)

    print("KERNEL_OK")
</pallas_src>

<mosaic_0001>
module attributes {stable_mosaic.version = 11 : i64} {
  func.func @_unshuffle_kernel(%arg0: i32, %arg1: i32, %arg2: i32, %arg3: memref<1x1x2x2x8x8x8xf32, #tpu.memory_space<vmem>>, %arg4: memref<32x32xf32, #tpu.memory_space<vmem>>, %arg5: memref<1x8x1x8x32xf32, #tpu.memory_space<vmem>>) attributes {dimension_semantics = [#tpu.dimension_semantics<parallel>, #tpu.dimension_semantics<parallel>, #tpu.dimension_semantics<parallel>], iteration_bounds = array<i64: 6, 2, 1>, scalar_prefetch = 0 : i64, scratch_operands = 0 : i64, tpu.core_type = #tpu.core_type<tc>, window_params = [{transform_indices = @transform_0, window_bounds = array<i64: 1, 1, 2, 2, 8, 8, 8>}, {pipeline_mode = #tpu.pipeline_mode<synchronous>, transform_indices = @transform_1, window_bounds = array<i64: 32, 32>}, {transform_indices = @transform_2, window_bounds = array<i64: 1, 8, 1, 8, 32>}]} {
    %c0 = arith.constant 0 : index
    %c0_0 = arith.constant 0 : index
    %c0_1 = arith.constant 0 : index
    %c0_2 = arith.constant 0 : index
    %c0_3 = arith.constant 0 : index
    %c0_4 = arith.constant 0 : index
    %c0_5 = arith.constant 0 : index
    %0 = vector.load %arg3[%c0, %c0_0, %c0_1, %c0_2, %c0_3, %c0_4, %c0_5] : memref<1x1x2x2x8x8x8xf32, #tpu.memory_space<vmem>>, vector<1x1x1x1x8x8x8xf32>
    %1 = vector.shape_cast %0 : vector<1x1x1x1x8x8x8xf32> to vector<8x8x8xf32>
    %2 = vector.shape_cast %1 : vector<8x8x8xf32> to vector<64x8xf32>
    %c0_6 = arith.constant 0 : index
    %c0_7 = arith.constant 0 : index
    %c0_8 = arith.constant 0 : index
    %c1 = arith.constant 1 : index
    %c0_9 = arith.constant 0 : index
    %c0_10 = arith.constant 0 : index
    %c0_11 = arith.constant 0 : index
    %3 = vector.load %arg3[%c0_6, %c0_7, %c0_8, %c1, %c0_9, %c0_10, %c0_11] : memref<1x1x2x2x8x8x8xf32, #tpu.memory_space<vmem>>, vector<1x1x1x1x8x8x8xf32>
    %4 = vector.shape_cast %3 : vector<1x1x1x1x8x8x8xf32> to vector<8x8x8xf32>
    %5 = vector.shape_cast %4 : vector<8x8x8xf32> to vector<64x8xf32>
    %c0_12 = arith.constant 0 : index
    %c0_13 = arith.constant 0 : index
    %c1_14 = arith.constant 1 : index
    %c0_15 = arith.constant 0 : index
    %c0_16 = arith.constant 0 : index
    %c0_17 = arith.constant 0 : index
    %c0_18 = arith.constant 0 : index
    %6 = vector.load %arg3[%c0_12, %c0_13, %c1_14, %c0_15, %c0_16, %c0_17, %c0_18] : memref<1x1x2x2x8x8x8xf32, #tpu.memory_space<vmem>>, vector<1x1x1x1x8x8x8xf32>
    %7 = vector.shape_cast %6 : vector<1x1x1x1x8x8x8xf32> to vector<8x8x8xf32>
    %8 = vector.shape_cast %7 : vector<8x8x8xf32> to vector<64x8xf32>
    %c0_19 = arith.constant 0 : index
    %c0_20 = arith.constant 0 : index
    %c1_21 = arith.constant 1 : index
    %c1_22 = arith.constant 1 : index
    %c0_23 = arith.constant 0 : index
    %c0_24 = arith.constant 0 : index
    %c0_25 = arith.constant 0 : index
    %9 = vector.load %arg3[%c0_19, %c0_20, %c1_21, %c1_22, %c0_23, %c0_24, %c0_25] : memref<1x1x2x2x8x8x8xf32, #tpu.memory_space<vmem>>, vector<1x1x1x1x8x8x8xf32>
    %10 = vector.shape_cast %9 : vector<1x1x1x1x8x8x8xf32> to vector<8x8x8xf32>
    %11 = vector.shape_cast %10 : vector<8x8x8xf32> to vector<64x8xf32>
    %12 = tpu.concatenate %2, %5, %8, %11 in 1 : vector<64x8xf32>, vector<64x8xf32>, vector<64x8xf32>, vector<64x8xf32> -> vector<64x32xf32>
    %c0_26 = arith.constant 0 : index
    %c0_27 = arith.constant 0 : index
    %13 = vector.load %arg4[%c0_26, %c0_27] : memref<32x32xf32, #tpu.memory_space<vmem>>, vector<32x32xf32>
    %cst = arith.constant dense<0.000000e+00> : vector<64x32xf32>
    %14 = tpu.matmul %12, %13, %cst {dimension_numbers = #tpu.dot_dimension_numbers<[1], [0], [0], [1], [0, 0, 1, 1], [], []>, precision = #tpu.contract_precision<fp32>} : vector<64x32xf32>, vector<32x32xf32>, vector<64x32xf32> -> vector<64x32xf32>
    %15 = vector.shape_cast %14 : vector<64x32xf32> to vector<8x1x8x32xf32>
    %c0_28 = arith.constant 0 : index
    %c0_29 = arith.constant 0 : index
    %c0_30 = arith.constant 0 : index
    %c0_31 = arith.constant 0 : index
    %c0_32 = arith.constant 0 : index
    %16 = vector.load %arg5[%c0_28, %c0_29, %c0_30, %c0_31, %c0_32] : memref<1x8x1x8x32xf32, #tpu.memory_space<vmem>>, vector<1x8x1x8x32xf32>
    %17 = vector.shape_cast %16 : vector<1x8x1x8x32xf32> to vector<8x1x8x32xf32>
    %18 = vector.shape_cast %15 : vector<8x1x8x32xf32> to vector<1x8x1x8x32xf32>
    tpu.vector_store %arg5[%c0_28, %c0_29, %c0_30, %c0_31, %c0_32], %18 {strides = array<i32>} : memref<1x8x1x8x32xf32, #tpu.memory_space<vmem>>, vector<1x8x1x8x32xf32>,
    return
  }
  func.func @transform_0(%arg0: i32, %arg1: i32, %arg2: i32) -> (i32, i32, i32, i32, i32, i32, i32) {
    %c0_i32 = arith.constant 0 : i32
    %c0_i32_0 = arith.constant 0 : i32
    %c0_i32_1 = arith.constant 0 : i32
    %c0_i32_2 = arith.constant 0 : i32
    %c0_i32_3 = arith.constant 0 : i32
    return %arg0, %arg1, %c0_i32, %c0_i32_0, %arg2, %c0_i32_1, %c0_i32_2 : i32, i32, i32, i32, i32, i32, i32
  }
  func.func @transform_1(%arg0: i32, %arg1: i32, %arg2: i32) -> (i32, i32) {
    %c0_i32 = arith.constant 0 : i32
    %c0_i32_0 = arith.constant 0 : i32
    %c0_i32_1 = arith.constant 0 : i32
    return %c0_i32, %c0_i32_0 : i32, i32
  }
  func.func @transform_2(%arg0: i32, %arg1: i32, %arg2: i32) -> (i32, i32, i32, i32, i32) {
    %c0_i32 = arith.constant 0 : i32
    %c0_i32_0 = arith.constant 0 : i32
    %c0_i32_1 = arith.constant 0 : i32
    return %arg0, %arg2, %arg1, %c0_i32, %c0_i32_0 : i32, i32, i32, i32, i32
  }
}

</mosaic_0001>

<llo_original>
// kernel: tpu_custom_call.1
$region0: #{tpu_custom_call.1}
  #allocation0 [shape = 'u32[]', space=smem, size = 0x4, offset = 0x4, fixed_abs, tag = 'smem constant byte address 0x4 - core index']
  #allocation1 [shape = 'u32[144,128]{1,0:T(1,128)}', space=vmem, size = 0x12000, scoped, tag = 'internal scratch']
  %s0 = inlined_call_operand.hbm [shape: f32[6,2,2,2,8,8,8], index: 0, kind: input, shape index: {}]
  %s1 = inlined_call_operand.hbm [shape: f32[32,32], index: 1, kind: input, shape index: {}]
  %s2 = inlined_call_operand.hbm [shape: f32[6,8,2,8,32], index: 2, kind: output, shape index: {}]
  %s3 = sld [smem:[#allocation0]]
  $region49: #{tpu_custom_call.1} parent=0
    _
  %s5 = ssub.s32 1, %s3
  %s6 = scalar_select 0, %s5, %s3
  $region1: #{tpu_custom_call.1} parent=0
    #allocation2 [shape = 'u8[262144]{0}', space=vmem, size = 0x40000, scoped, tag = 'input window, operand 0']
    #allocation3 [shape = 's32[2]{0}', space=sflag, size = 0x8, scoped, tag = 'scoped memory for tpu_custom_call.1']
    #allocation4 [shape = 's32[2]{0}', space=sflag, size = 0x8, scoped, tag = 'scoped memory for tpu_custom_call.1']
    #allocation5 [shape = 'u8[16384]{0}', space=vmem, size = 0x4000, scoped, tag = 'input window, operand 1, single buffered']
    #allocation6 [shape = 's32[1]{0}', space=sflag, size = 0x4, scoped, tag = 'scoped memory for tpu_custom_call.1']
    #allocation7 [shape = 'u8[65536]{0}', space=vmem, size = 0x10000, scoped, tag = 'output window, operand 0']
    %7 = vsyncpa [#allocation3], 0
    %s8 = scalar_lea.sflag [#allocation3], 1
    %9 = vsyncpa %s8, 0
    %10 = vsyncpa [#allocation6], 0
    %11 = vsyncpa [#allocation4], 0
    %s12 = scalar_lea.sflag [#allocation4], 1
    %13 = vsyncpa %s12, 0
    loop: start=0, step=1, limit=14
    $region2: #{tpu_custom_call.1} parent=1 // loop_pre_header
      _
    $region3: #{tpu_custom_call.1} parent=1 // loop_header
      %s15 = sphi 0, %s19
      %p16 = scmp.ge.s32.totalorder %s15, 14
      %s22 = sphi 0, %s41
      %s23 = sphi 0, %s37
      %s24 = sphi 0, %s33
      %s25 = sphi 0, %s22
      %s26 = sphi 0, %s23
      %s27 = sphi 0, %s24
      %s28 = sphi 0, %s25
      %s29 = sphi 0, %s26
      %s30 = sphi 0, %s27
      %s48 = sphi 0, %s50
      %s51 = sphi 0, %s48
      %s52 = sphi 0, %s51
      %s68 = sphi 0, %s52
      %s72 = sphi 0, %s72
      %s74 = sphi 0, %s72
      %s75 = sphi 0, %s74
      %s89 = sphi 0, %s75
      %s99 = sphi 0, %s101
      %s102 = sphi 0, %s99
      %s103 = sphi 0, %s102
      %s119 = sphi 0, %s103
    $region4: #{tpu_custom_call.1} parent=1 // loop_header_branch
      %18 = sbr.rel (%p16) target = $region8
    $region5: #{tpu_custom_call.1} parent=1 // loop_body
      %s20 = ssub.s32 %s15, 1
      %s21 = ssub.s32 %s15, 2
      %s31 = sadd.s32 1, %s24
      %p32 = scmp.ge.s32.totalorder %s31, 1
      %s33 = scalar_select %p32, 0, %s31
      %s34 = sadd.s32 1, %s23
      %s35 = scalar_select %p32, %s34, %s23
      %p36 = scmp.ge.s32.totalorder %s35, 2
      %s37 = scalar_select %p36, 0, %s35
      %s38 = sadd.s32 1, %s22
      %s39 = scalar_select %p36, %s38, %s22
      %p40 = scmp.ge.s32.totalorder %s39, 6
      %s41 = scalar_select %p40, 0, %s39
      %s42 = ssub.s32 %s22, %s41
      %s43 = ssub.s32 %s23, %s37
      %s44 = sor.u32 %s42, %s43
      %s45 = ssub.s32 %s24, %s33
      %s46 = sor.u32 %s44, %s45
      %p47 = scmp.eq.s32.totalorder %s46, 0
      %s49 = sadd.s32 %s48, 1
      %s50 = scalar_select %p47, %s48, %s49
      %p53 = pneg %p47
      %p54 = scmp.eq.s32.totalorder %s15, 11
      %p55 = por %p53, %p54
      %p56 = scmp.ne.s32.totalorder %s48, %s51
      %p57 = scmp.eq.s32.totalorder %s15, 0
      %p58 = por %p56, %p57
      %p59 = scmp.ne.s32.totalorder %s48, %s51
      %p60 = scmp.eq.s32.totalorder %s20, 11
      %p61 = por %p59, %p60
      %p62 = scmp.ne.s32.totalorder %s51, %s52
      %p63 = scmp.eq.s32.totalorder %s20, 0
      %p64 = por %p62, %p63
      %p65 = scmp.ne.s32.totalorder %s51, %s52
      %p66 = scmp.eq.s32.totalorder %s21, 11
      %p67 = por %p65, %p66
      %p69 = scmp.ne.s32.totalorder %s52, %s68
      %p70 = scmp.eq.s32.totalorder %s21, 0
      %p71 = por %p69, %p70
      %s73 = sadd.s32 %s72, 1
      %p76 = scmp.eq.s32.totalorder %s15, 11
      %p77 = scmp.ne.s32.totalorder %s72, %s74
      %p78 = scmp.eq.s32.totalorder %s15, 0
      %p79 = por %p77, %p78
      %p80 = scmp.ne.s32.totalorder %s72, %s74
      %p81 = scmp.eq.s32.totalorder %s20, 11
      %p82 = por %p80, %p81
      %p83 = scmp.ne.s32.totalorder %s74, %s75
      %p84 = scmp.eq.s32.totalorder %s20, 0
      %p85 = por %p83, %p84
      %p86 = scmp.ne.s32.totalorder %s74, %s75
      %p87 = scmp.eq.s32.totalorder %s21, 11
      %p88 = por %p86, %p87
      %p90 = scmp.ne.s32.totalorder %s75, %s89
      %p91 = scmp.eq.s32.totalorder %s21, 0
      %p92 = por %p90, %p91
      %s93 = ssub.s32 %s22, %s41
      %s94 = ssub.s32 %s24, %s33
      %s95 = sor.u32 %s93, %s94
      %s96 = ssub.s32 %s23, %s37
      %s97 = sor.u32 %s95, %s96
      %p98 = scmp.eq.s32.totalorder %s97, 0
      %s100 = sadd.s32 %s99, 1
      %s101 = scalar_select %p98, %s99, %s100
      %p104 = pneg %p98
      %p105 = scmp.eq.s32.totalorder %s15, 11
      %p106 = por %p104, %p105
      %p107 = scmp.ne.s32.totalorder %s99, %s102
      %p108 = scmp.eq.s32.totalorder %s15, 0
      %p109 = por %p107, %p108
      %p110 = scmp.ne.s32.totalorder %s99, %s102
      %p111 = scmp.eq.s32.totalorder %s20, 11
      %p112 = por %p110, %p111
      %p113 = scmp.ne.s32.totalorder %s102, %s103
      %p114 = scmp.eq.s32.totalorder %s20, 0
      %p115 = por %p113, %p114
      %p116 = scmp.ne.s32.totalorder %s102, %s103
      %p117 = scmp.eq.s32.totalorder %s21, 11
      %p118 = por %p116, %p117
      %p120 = scmp.ne.s32.totalorder %s103, %s119
      %p121 = scmp.eq.s32.totalorder %s21, 0
      %p122 = por %p120, %p121
      %p123 = scmp.le.s32.totalorder 1, %s15
      %p124 = scmp.lt.s32.totalorder %s15, 13
      %p125 = pnand %p123, %p124
      %p126 = pneg %p125
      // Predicated region
      $region9: #{tpu_custom_call.1} parent=5 // pred_check
        _
      $region10: #{tpu_custom_call.1} parent=5 // pred_check_branch
        %128 = sbr.rel (%p125) target = $region12
      $region11: #{tpu_custom_call.1} parent=5 // pred_region
        %s129 = ssub.s32 %s15, 1
        // Predicated region
        $region13: #{tpu_custom_call.1} parent=11 // pred_check
          %p130 = pneg %p85
        $region14: #{tpu_custom_call.1} parent=11 // pred_check_branch
          %132 = sbr.rel (%p130) target = $region16
        $region15: #{tpu_custom_call.1} parent=11 // pred_region
          %s134 = ssub.s32 512, 512
          %135 = vsyncadd [#allocation6], %s134
          %s136 = sshll.u32 [#allocation5], 4
          %s137 = int_to_ptr.vmem [resolvable:$true] %s136
          %142 = dma.hbm_to_vmem [thread:$0]  %s1, 512, %s137, [#allocation6], 128, 128, 8
        $region16: #{tpu_custom_call.1} parent=11 // pred_fallthru
          _
      $region12: #{tpu_custom_call.1} parent=5 // pred_fallthru
        _
      %p143 = scmp.lt.s32.totalorder %s15, 12
      // Predicated region
      $region17: #{tpu_custom_call.1} parent=5 // pred_check
        %p144 = pneg %p143
      $region18: #{tpu_custom_call.1} parent=5 // pred_check_branch
        %146 = sbr.rel (%p144) target = $region20
      $region19: #{tpu_custom_call.1} parent=5 // pred_region
        // Predicated region
        $region21: #{tpu_custom_call.1} parent=19 // pred_check
          %p147 = pneg %p58
        $region22: #{tpu_custom_call.1} parent=19 // pred_check_branch
          %149 = sbr.rel (%p147) target = $region24
        $region23: #{tpu_custom_call.1} parent=19 // pred_region
          %s150 = sand.u32 %s48, 1
          %s151 = scalar_lea.sflag [#allocation3], %s150
          %s152 = sand.u32 %s48, 1
          %s153 = smul.addr %s152, 256
          %s154 = scalar_lea.vmem [#allocation2], %s153
          %s155 = smul.u32 8, %s24
          %s157 = ssub.s32 4096, 4096
          %158 = vsyncadd %s151, %s157
          %s159 = smul.addr %s23, 32
          %s160 = sadd.s32 %s155, %s159
          %s161 = smul.addr %s22, 64
          %s162 = sadd.s32 %s160, %s161
          %s163 = smul.addr %s162, 128
          %s164 = scalar_lea.hbm %s0, %s163
          %s165 = sshll.u32 %s154, 4
          %s166 = int_to_ptr.vmem [resolvable:$true] %s165
          %171 = dma.hbm_to_vmem [thread:$0]  %s164, 4096, %s166, %s151, 128, 128, 8
        $region24: #{tpu_custom_call.1} parent=19 // pred_fallthru
          _
      $region20: #{tpu_custom_call.1} parent=5 // pred_fallthru
        _
      %p172 = scmp.le.s32.totalorder 1, %s15
      %p173 = scmp.lt.s32.totalorder %s15, 13
      %p174 = pnand %p172, %p173
      %p175 = pneg %p174
      // Predicated region
      $region25: #{tpu_custom_call.1} parent=5 // pred_check
        _
      $region26: #{tpu_custom_call.1} parent=5 // pred_check_branch
        %177 = sbr.rel (%p174) target = $region28
      $region27: #{tpu_custom_call.1} parent=5 // pred_region
        %s178 = ssub.s32 %s15, 1
        %s179 = sand.u32 %s51, 1
        %s180 = scalar_lea.sflag [#allocation3], %s179
        %s181 = sand.u32 %s51, 1
        %s182 = smul.addr %s181, 256
        %s183 = scalar_lea.vmem [#allocation2], %s182
        // Predicated region
        $region29: #{tpu_custom_call.1} parent=27 // pred_check
          %p184 = pneg %p64
        $region30: #{tpu_custom_call.1} parent=27 // pred_check_branch
          %186 = sbr.rel (%p184) target = $region32
        $region31: #{tpu_custom_call.1} parent=27 // pred_region
          %187 = dma.done %s180, 4096
        $region32: #{tpu_custom_call.1} parent=27 // pred_fallthru
          _
        // Predicated region
        $region33: #{tpu_custom_call.1} parent=27 // pred_check
          %p188 = pneg %p85
        $region34: #{tpu_custom_call.1} parent=27 // pred_check_branch
          %190 = sbr.rel (%p188) target = $region36
        $region35: #{tpu_custom_call.1} parent=27 // pred_region
          %191 = dma.done [#allocation6], 512
        $region36: #{tpu_custom_call.1} parent=27 // pred_fallthru
          _
        %s192 = sand.u32 %s51, 1
        %s193 = scalar_lea.sflag [#allocation3], %s192
        %s194 = sand.u32 %s51, 1
        %s195 = smul.addr %s194, 256
        %s196 = scalar_lea.vmem [#allocation2], %s195
        %p197 = pneg %p64
        %p198 = pneg %p61
        %p199 = pneg %p85
        %p200 = pneg %p82
        %p201 = pneg %p115
        %p202 = pneg %p112
        %s203 = sand.u32 %s102, 1
        %s204 = scalar_lea.sflag [#allocation4], %s203
        %s205 = sand.u32 %s102, 1
        %s206 = smul.addr %s205, 64
        %s207 = scalar_lea.vmem [#allocation7], %s206
        %s208 = smul.u32 8, %s27
        %s209 = smul.u32 8, %s27
        %v210 = vld [vmem:[%s183] sm:$0xff]
        %v211 = vld [vmem:[%s183 + $0x8] sm:$0xff]
        %v212 = vld [vmem:[%s183 + $0x10] sm:$0xff]
        %v213 = vld [vmem:[%s183 + $0x18] sm:$0xff]
        %v214 = vld [vmem:[%s183 + $0x20] sm:$0xff]
        %v215 = vld [vmem:[%s183 + $0x28] sm:$0xff]
        %v216 = vld [vmem:[%s183 + $0x30] sm:$0xff]
        %v217 = vld [vmem:[%s183 + $0x38] sm:$0xff]
        %s218 = scalar_lea.vmem %s183, 64 [#allocation2]
        %v219 = vld [vmem:[%s218] sm:$0xff]
        %v220 = vld [vmem:[%s218 + $0x8] sm:$0xff]
        %v221 = vld [vmem:[%s218 + $0x10] sm:$0xff]
        %v222 = vld [vmem:[%s218 + $0x18] sm:$0xff]
        %v223 = vld [vmem:[%s218 + $0x20] sm:$0xff]
        %v224 = vld [vmem:[%s218 + $0x28] sm:$0xff]
        %v225 = vld [vmem:[%s218 + $0x30] sm:$0xff]
        %v226 = vld [vmem:[%s218 + $0x38] sm:$0xff]
        %s227 = scalar_lea.vmem %s183, 128 [#allocation2]
        %v228 = vld [vmem:[%s227] sm:$0xff]
        %v229 = vld [vmem:[%s227 + $0x8] sm:$0xff]
        %v230 = vld [vmem:[%s227 + $0x10] sm:$0xff]
        %v231 = vld [vmem:[%s227 + $0x18] sm:$0xff]
        %v232 = vld [vmem:[%s227 + $0x20] sm:$0xff]
        %v233 = vld [vmem:[%s227 + $0x28] sm:$0xff]
        %v234 = vld [vmem:[%s227 + $0x30] sm:$0xff]
        %v235 = vld [vmem:[%s227 + $0x38] sm:$0xff]
        %s236 = scalar_lea.vmem %s183, 192 [#allocation2]
        %v237 = vld [vmem:[%s236] sm:$0xff]
        %v238 = vld [vmem:[%s236 + $0x8] sm:$0xff]
        %v239 = vld [vmem:[%s236 + $0x10] sm:$0xff]
        %v240 = vld [vmem:[%s236 + $0x18] sm:$0xff]
        %v241 = vld [vmem:[%s236 + $0x20] sm:$0xff]
        %v242 = vld [vmem:[%s236 + $0x28] sm:$0xff]
        %v243 = vld [vmem:[%s236 + $0x30] sm:$0xff]
        %v244 = vld [vmem:[%s236 + $0x38] sm:$0xff]
        %253 = vrot.lane.b32.xlu0 %v219, 8
        %v254 = vpop.permute.xlu0 %253
        %255 = vrot.lane.b32.xlu0 %v220, 8
        %v256 = vpop.permute.xlu0 %255
        %257 = vrot.lane.b32.xlu0 %v221, 8
        %v258 = vpop.permute.xlu0 %257
        %259 = vrot.lane.b32.xlu0 %v222, 8
        %v260 = vpop.permute.xlu0 %259
        %261 = vrot.lane.b32.xlu0 %v223, 8
        %v262 = vpop.permute.xlu0 %261
        %263 = vrot.lane.b32.xlu0 %v224, 8
        %v264 = vpop.permute.xlu0 %263
        %265 = vrot.lane.b32.xlu0 %v225, 8
        %v266 = vpop.permute.xlu0 %265
        %267 = vrot.lane.b32.xlu0 %v226, 8
        %v268 = vpop.permute.xlu0 %267
        %285 = vrot.lane.b32.xlu0 %v228, 16
        %v286 = vpop.permute.xlu0 %285
        %287 = vrot.lane.b32.xlu0 %v229, 16
        %v288 = vpop.permute.xlu0 %287
        %289 = vrot.lane.b32.xlu0 %v230, 16
        %v290 = vpop.permute.xlu0 %289
        %291 = vrot.lane.b32.xlu0 %v231, 16
        %v292 = vpop.permute.xlu0 %291
        %293 = vrot.lane.b32.xlu0 %v232, 16
        %v294 = vpop.permute.xlu0 %293
        %295 = vrot.lane.b32.xlu0 %v233, 16
        %v296 = vpop.permute.xlu0 %295
        %297 = vrot.lane.b32.xlu0 %v234, 16
        %v298 = vpop.permute.xlu0 %297
        %299 = vrot.lane.b32.xlu0 %v235, 16
        %v300 = vpop.permute.xlu0 %299
        %317 = vrot.lane.b32.xlu0 %v237, 24
        %v318 = vpop.permute.xlu0 %317
        %319 = vrot.lane.b32.xlu0 %v238, 24
        %v320 = vpop.permute.xlu0 %319
        %321 = vrot.lane.b32.xlu0 %v239, 24
        %v322 = vpop.permute.xlu0 %321
        %323 = vrot.lane.b32.xlu0 %v240, 24
        %v324 = vpop.permute.xlu0 %323
        %325 = vrot.lane.b32.xlu0 %v241, 24
        %v326 = vpop.permute.xlu0 %325
        %327 = vrot.lane.b32.xlu0 %v242, 24
        %v328 = vpop.permute.xlu0 %327
        %329 = vrot.lane.b32.xlu0 %v243, 24
        %v330 = vpop.permute.xlu0 %329
        %331 = vrot.lane.b32.xlu0 %v244, 24
        %v332 = vpop.permute.xlu0 %331
        %vm341 = vcmask 64512
        %v342 = vsel %vm341, %v210, %v254
        %v343 = vsel %vm341, %v211, %v256
        %v344 = vsel %vm341, %v212, %v258
        %v345 = vsel %vm341, %v213, %v260
        %v346 = vsel %vm341, %v214, %v262
        %v347 = vsel %vm341, %v215, %v264
        %v348 = vsel %vm341, %v216, %v266
        %v349 = vsel %vm341, %v217, %v268
        %vm350 = vcmask 130048
        %v351 = vsel %vm350, %v342, %v286
        %v352 = vsel %vm350, %v343, %v288
        %v353 = vsel %vm350, %v344, %v290
        %v354 = vsel %vm350, %v345, %v292
        %v355 = vsel %vm350, %v346, %v294
        %v356 = vsel %vm350, %v347, %v296
        %v357 = vsel %vm350, %v348, %v298
        %v358 = vsel %vm350, %v349, %v300
        %vm359 = vcmask 195584
        %v360 = vsel %vm359, %v351, %v318
        %v361 = vsel %vm359, %v352, %v320
        %v362 = vsel %vm359, %v353, %v322
        %v363 = vsel %vm359, %v354, %v324
        %v364 = vsel %vm359, %v355, %v326
        %v365 = vsel %vm359, %v356, %v328
        %v366 = vsel %vm359, %v357, %v330
        %v367 = vsel %vm359, %v358, %v332
        %v368 = vld [vmem:[#allocation5] sm:$0xff]
        %v369 = vld [vmem:[#allocation5 + $0x8] sm:$0xff]
        %v370 = vld [vmem:[#allocation5 + $0x10] sm:$0xff]
        %v371 = vld [vmem:[#allocation5 + $0x18] sm:$0xff]
        %vm372 = vcmask 261120
        %v374 = vsel %vm372, %v360, 0
        %v377 = vsel %vm372, %v361, 0
        %v380 = vsel %vm372, %v362, 0
        %v383 = vsel %vm372, %v363, 0
        %v386 = vsel %vm372, %v364, 0
        %v389 = vsel %vm372, %v365, 0
        %v392 = vsel %vm372, %v366, 0
        %v395 = vsel %vm372, %v367, 0
        %397 = vmatprep.subr.mxu0 0.0
        %v398 = vand.u32 %v368, 4294901760
        %399 = vmatpush1.msra.mxu0 %v398
        %400 = vmatprep.subr.mxu0 0.0
        %v401 = vand.u32 %v369, 4294901760
        %402 = vmatpush1.msra.mxu0 %v401
        %403 = vmatprep.subr.mxu0 0.0
        %v404 = vand.u32 %v370, 4294901760
        %405 = vmatpush1.msra.mxu0 %v404
        %406 = vmatprep.subr.mxu0 0.0
        %v407 = vand.u32 %v371, 4294901760
        %408 = vmatpush1.msra.mxu0 %v407
        %409 = vmatprep.subr.mxu0 0.0
        %410 = vmatpush1.msra.mxu0 0.0
        %411 = vmatprep.subr.mxu0 0.0
        %412 = vmatpush1.msra.mxu0 0.0
        %413 = vmatprep.subr.mxu0 0.0
        %414 = vmatpush1.msra.mxu0 0.0
        %415 = vmatprep.subr.mxu0 0.0
        %416 = vmatpush1.msra.mxu0 0.0
        %417 = vmatprep.subr.mxu0 0.0
        %418 = vmatpush1.msra.mxu0 0.0
        %419 = vmatprep.subr.mxu0 0.0
        %420 = vmatpush1.msra.mxu0 0.0
        %421 = vmatprep.subr.mxu0 0.0
        %422 = vmatpush1.msra.mxu0 0.0
        %423 = vmatprep.subr.mxu0 0.0
        %424 = vmatpush1.msra.mxu0 0.0
        %425 = vmatprep.subr.mxu0 0.0
        %426 = vmatpush1.msra.mxu0 0.0
        %427 = vmatprep.subr.mxu0 0.0
        %428 = vmatpush1.msra.mxu0 0.0
        %429 = vmatprep.subr.mxu0 0.0
        %430 = vmatpush1.msra.mxu0 0.0
        %431 = vmatprep.subr.mxu0 0.0
        %432 = vmatpush1.msra.mxu0 0.0
        %433 = vmatprep.subr.mxu0 0.0
        %434 = vmatpush1.msra.mxu0 0.0
        %435 = vmatprep.subr.mxu0 0.0
        %436 = vmatpush1.msra.mxu0 0.0
        %437 = vmatprep.subr.mxu0 0.0
        %438 = vmatpush1.msra.mxu0 0.0
        %439 = vmatprep.subr.mxu0 0.0
        %440 = vmatpush1.msra.mxu0 0.0
        %441 = vmatprep.subr.mxu0 0.0
        %442 = vmatpush1.msra.mxu0 0.0
        %443 = vmatprep.subr.mxu0 0.0
        %444 = vmatpush1.msra.mxu0 0.0
        %445 = vmatprep.subr.mxu0 0.0
        %446 = vmatpush1.msra.mxu0 0.0
        %447 = vmatprep.subr.mxu0 0.0
        %448 = vmatpush1.msra.mxu0 0.0
        %449 = vmatprep.subr.mxu0 0.0
        %450 = vmatpush1.msra.mxu0 0.0
        %451 = vmatprep.subr.mxu0 0.0
        %452 = vmatpush1.msra.mxu0 0.0
        %453 = vmatprep.subr.mxu0 0.0
        %454 = vmatpush1.msra.mxu0 0.0
        %455 = vmatprep.subr.mxu0 0.0
        %456 = vmatpush1.msra.mxu0 0.0
        %457 = vmatprep.subr.mxu0 0.0
        %458 = vmatpush1.msra.mxu0 0.0
        %459 = vmatprep.subr.mxu0 0.0
        %460 = vmatpush1.msra.mxu0 0.0
        %461 = vmatprep.subr.mxu0 0.0
        %462 = vmatpush1.msra.mxu0 0.0
        %463 = vmatprep.subr.mxu0 0.0
        %464 = vmatpush1.msra.mxu0 0.0
        %465 = vmatprep.mubr.f32.mxu0 0.0
        %v466 = vand.u32 %v374, 4294901760
        %v467 = vsub.f32 %v374, %v466
        %v468 = vand.u32 %v467, 4294901760
        %v469 = vsub.f32 %v467, %v468
        %v470 = vand.u32 %v469, 4294901760
        %471 = vmatmul.mubr.f32.gmra.mrb[0].mxu0 %v470
        %v472 = vpop.f32.mrb[0].mxu0
        %v473 = vadd.f32 0.0, %v472
        %v474 = vpop.f32.mrb[0].mxu0
        %475 = vmatprep.mubr.f32.mxu0 0.0
        %v476 = vand.u32 %v377, 4294901760
        %v477 = vsub.f32 %v377, %v476
        %v478 = vand.u32 %v477, 4294901760
        %v479 = vsub.f32 %v477, %v478
        %v480 = vand.u32 %v479, 4294901760
        %481 = vmatmul.mubr.f32.gmra.mrb[0].mxu0 %v480
        %v482 = vpop.f32.mrb[0].mxu0
        %v483 = vadd.f32 0.0, %v482
        %v484 = vpop.f32.mrb[0].mxu0
        %485 = vmatprep.mubr.f32.mxu0 0.0
        %v486 = vand.u32 %v380, 4294901760
        %v487 = vsub.f32 %v380, %v486
        %v488 = vand.u32 %v487, 4294901760
        %v489 = vsub.f32 %v487, %v488
        %v490 = vand.u32 %v489, 4294901760
        %491 = vmatmul.mubr.f32.gmra.mrb[0].mxu0 %v490
        %v492 = vpop.f32.mrb[0].mxu0
        %v493 = vadd.f32 0.0, %v492
        %v494 = vpop.f32.mrb[0].mxu0
        %495 = vmatprep.mubr.f32.mxu0 0.0
        %v496 = vand.u32 %v383, 4294901760
        %v497 = vsub.f32 %v383, %v496
        %v498 = vand.u32 %v497, 4294901760
        %v499 = vsub.f32 %v497, %v498
        %v500 = vand.u32 %v499, 4294901760
        %501 = vmatmul.mubr.f32.gmra.mrb[0].mxu0 %v500
        %v502 = vpop.f32.mrb[0].mxu0
        %v503 = vadd.f32 0.0, %v502
        %v504 = vpop.f32.mrb[0].mxu0
        %505 = vmatprep.mubr.f32.mxu0 0.0
        %v506 = vand.u32 %v386, 4294901760
        %v507 = vsub.f32 %v386, %v506
        %v508 = vand.u32 %v507, 4294901760
        %v509 = vsub.f32 %v507, %v508
        %v510 = vand.u32 %v509, 4294901760
        %511 = vmatmul.mubr.f32.gmra.mrb[0].mxu0 %v510
        %v512 = vpop.f32.mrb[0].mxu0
        %v513 = vadd.f32 0.0, %v512
        %v514 = vpop.f32.mrb[0].mxu0
        %515 = vmatprep.mubr.f32.mxu0 0.0
        %v516 = vand.u32 %v389, 4294901760
        %v517 = vsub.f32 %v389, %v516
        %v518 = vand.u32 %v517, 4294901760
        %v519 = vsub.f32 %v517, %v518
        %v520 = vand.u32 %v519, 4294901760
        %521 = vmatmul.mubr.f32.gmra.mrb[0].mxu0 %v520
        %v522 = vpop.f32.mrb[0].mxu0
        %v523 = vadd.f32 0.0, %v522
        %v524 = vpop.f32.mrb[0].mxu0
        %525 = vmatprep.mubr.f32.mxu0 0.0
        %v526 = vand.u32 %v392, 4294901760
        %v527 = vsub.f32 %v392, %v526
        %v528 = vand.u32 %v527, 4294901760
        %v529 = vsub.f32 %v527, %v528
        %v530 = vand.u32 %v529, 4294901760
        %531 = vmatmul.mubr.f32.gmra.mrb[0].mxu0 %v530
        %v532 = vpop.f32.mrb[0].mxu0
        %v533 = vadd.f32 0.0, %v532
        %v534 = vpop.f32.mrb[0].mxu0
        %535 = vmatprep.mubr.f32.mxu0 0.0
        %v536 = vand.u32 %v395, 4294901760
        %v537 = vsub.f32 %v395, %v536
        %v538 = vand.u32 %v537, 4294901760
        %v539 = vsub.f32 %v537, %v538
        %v540 = vand.u32 %v539, 4294901760
        %541 = vmatmul.mubr.f32.gmra.mrb[0].mxu0 %v540
        %v542 = vpop.f32.mrb[0].mxu0
        %v543 = vadd.f32 0.0, %v542
        %v544 = vpop.f32.mrb[0].mxu0
        %545 = vdwg.mxu0
        %546 = vmatprep.subr.mxu0 0.0
        %v547 = vand.u32 %v368, 4294901760
        %v548 = vsub.f32 %v368, %v547
        %v549 = vand.u32 %v548, 4294901760
        %v550 = vsub.f32 %v548, %v549
        %v551 = vand.u32 %v550, 4294901760
        %552 = vmatpush1.msra.mxu0 %v551
        %553 = vmatprep.subr.mxu0 0.0
        %v554 = vand.u32 %v369, 4294901760
        %v555 = vsub.f32 %v369, %v554
        %v556 = vand.u32 %v555, 4294901760
        %v557 = vsub.f32 %v555, %v556
        %v558 = vand.u32 %v557, 4294901760
        %559 = vmatpush1.msra.mxu0 %v558
        %560 = vmatprep.subr.mxu0 0.0
        %v561 = vand.u32 %v370, 4294901760
        %v562 = vsub.f32 %v370, %v561
        %v563 = vand.u32 %v562, 4294901760
        %v564 = vsub.f32 %v562, %v563
        %v565 = vand.u32 %v564, 4294901760
        %566 = vmatpush1.msra.mxu0 %v565
        %567 = vmatprep.subr.mxu0 0.0
        %v568 = vand.u32 %v371, 4294901760
        %v569 = vsub.f32 %v371, %v568
        %v570 = vand.u32 %v569, 4294901760
        %v571 = vsub.f32 %v569, %v570
        %v572 = vand.u32 %v571, 4294901760
        %573 = vmatpush1.msra.mxu0 %v572
        %574 = vmatprep.subr.mxu0 0.0
        %575 = vmatpush1.msra.mxu0 0.0
        %576 = vmatprep.subr.mxu0 0.0
        %577 = vmatpush1.msra.mxu0 0.0
        %578 = vmatprep.subr.mxu0 0.0
        %579 = vmatpush1.msra.mxu0 0.0
        %580 = vmatprep.subr.mxu0 0.0
        %581 = vmatpush1.msra.mxu0 0.0
        %582 = vmatprep.subr.mxu0 0.0
        %583 = vmatpush1.msra.mxu0 0.0
        %584 = vmatprep.subr.mxu0 0.0
        %585 = vmatpush1.msra.mxu0 0.0
        %586 = vmatprep.subr.mxu0 0.0
        %587 = vmatpush1.msra.mxu0 0.0
        %588 = vmatprep.subr.mxu0 0.0
        %589 = vmatpush1.msra.mxu0 0.0
        %590 = vmatprep.subr.mxu0 0.0
        %591 = vmatpush1.msra.mxu0 0.0
        %592 = vmatprep.subr.mxu0 0.0
        %593 = vmatpush1.msra.mxu0 0.0
        %594 = vmatprep.subr.mxu0 0.0
        %595 = vmatpush1.msra.mxu0 0.0
        %596 = vmatprep.subr.mxu0 0.0
        %597 = vmatpush1.msra.mxu0 0.0
        %598 = vmatprep.subr.mxu0 0.0
        %599 = vmatpush1.msra.mxu0 0.0
        %600 = vmatprep.subr.mxu0 0.0
        %601 = vmatpush1.msra.mxu0 0.0
        %602 = vmatprep.subr.mxu0 0.0
        %603 = vmatpush1.msra.mxu0 0.0
        %604 = vmatprep.subr.mxu0 0.0
        %605 = vmatpush1.msra.mxu0 0.0
        %606 = vmatprep.subr.mxu0 0.0
        %607 = vmatpush1.msra.mxu0 0.0
        %608 = vmatprep.subr.mxu0 0.0
        %609 = vmatpush1.msra.mxu0 0.0
        %610 = vmatprep.subr.mxu0 0.0
        %611 = vmatpush1.msra.mxu0 0.0
        %612 = vmatprep.subr.mxu0 0.0
        %613 = vmatpush1.msra.mxu0 0.0
        %614 = vmatprep.subr.mxu0 0.0
        %615 = vmatpush1.msra.mxu0 0.0
        %616 = vmatprep.subr.mxu0 0.0
        %617 = vmatpush1.msra.mxu0 0.0
        %618 = vmatprep.subr.mxu0 0.0
        %619 = vmatpush1.msra.mxu0 0.0
        %620 = vmatprep.subr.mxu0 0.0
        %621 = vmatpush1.msra.mxu0 0.0
        %622 = vmatprep.subr.mxu0 0.0
        %623 = vmatpush1.msra.mxu0 0.0
        %624 = vmatprep.subr.mxu0 0.0
        %625 = vmatpush1.msra.mxu0 0.0
        %626 = vmatprep.subr.mxu0 0.0
        %627 = vmatpush1.msra.mxu0 0.0
        %628 = vmatprep.subr.mxu0 0.0
        %629 = vmatpush1.msra.mxu0 0.0
        %630 = vmatprep.mubr.f32.mxu0 0.0
        %v631 = vand.u32 %v374, 4294901760
        %632 = vmatmul.mubr.f32.gmra.mrb[0].mxu0 %v631
        %v633 = vpop.f32.mrb[0].mxu0
        %v634 = vadd.f32 %v473, %v633
        %v635 = vpop.f32.mrb[0].mxu0
        %636 = vmatprep.mubr.f32.mxu0 0.0
        %v637 = vand.u32 %v377, 4294901760
        %638 = vmatmul.mubr.f32.gmra.mrb[0].mxu0 %v637
        %v639 = vpop.f32.mrb[0].mxu0
        %v640 = vadd.f32 %v483, %v639
        %v641 = vpop.f32.mrb[0].mxu0
        %642 = vmatprep.mubr.f32.mxu0 0.0
        %v643 = vand.u32 %v380, 4294901760
        %644 = vmatmul.mubr.f32.gmra.mrb[0].mxu0 %v643
        %v645 = vpop.f32.mrb[0].mxu0
        %v646 = vadd.f32 %v493, %v645
        %v647 = vpop.f32.mrb[0].mxu0
        %648 = vmatprep.mubr.f32.mxu0 0.0
        %v649 = vand.u32 %v383, 4294901760
        %650 = vmatmul.mubr.f32.gmra.mrb[0].mxu0 %v649
        %v651 = vpop.f32.mrb[0].mxu0
        %v652 = vadd.f32 %v503, %v651
        %v653 = vpop.f32.mrb[0].mxu0
        %654 = vmatprep.mubr.f32.mxu0 0.0
        %v655 = vand.u32 %v386, 4294901760
        %656 = vmatmul.mubr.f32.gmra.mrb[0].mxu0 %v655
        %v657 = vpop.f32.mrb[0].mxu0
        %v658 = vadd.f32 %v513, %v657
        %v659 = vpop.f32.mrb[0].mxu0
        %660 = vmatprep.mubr.f32.mxu0 0.0
        %v661 = vand.u32 %v389, 4294901760
        %662 = vmatmul.mubr.f32.gmra.mrb[0].mxu0 %v661
        %v663 = vpop.f32.mrb[0].mxu0
        %v664 = vadd.f32 %v523, %v663
        %v665 = vpop.f32.mrb[0].mxu0
        %666 = vmatprep.mubr.f32.mxu0 0.0
        %v667 = vand.u32 %v392, 4294901760
        %668 = vmatmul.mubr.f32.gmra.mrb[0].mxu0 %v667
        %v669 = vpop.f32.mrb[0].mxu0
        %v670 = vadd.f32 %v533, %v669
        %v671 = vpop.f32.mrb[0].mxu0
        %672 = vmatprep.mubr.f32.mxu0 0.0
        %v673 = vand.u32 %v395, 4294901760
        %674 = vmatmul.mubr.f32.gmra.mrb[0].mxu0 %v673
        %v675 = vpop.f32.mrb[0].mxu0
        %v676 = vadd.f32 %v543, %v675
        %v677 = vpop.f32.mrb[0].mxu0
        %678 = vdwg.mxu0
        %679 = vmatprep.subr.mxu0 0.0
        %v680 = vand.u32 %v368, 4294901760
        %v681 = vsub.f32 %v368, %v680
        %682 = vmatpush1.msra.mxu0 %v681
        %683 = vmatprep.subr.mxu0 0.0
        %v684 = vand.u32 %v369, 4294901760
        %v685 = vsub.f32 %v369, %v684
        %686 = vmatpush1.msra.mxu0 %v685
        %687 = vmatprep.subr.mxu0 0.0
        %v688 = vand.u32 %v370, 4294901760
        %v689 = vsub.f32 %v370, %v688
        %690 = vmatpush1.msra.mxu0 %v689
        %691 = vmatprep.subr.mxu0 0.0
        %v692 = vand.u32 %v371, 4294901760
        %v693 = vsub.f32 %v371, %v692
        %694 = vmatpush1.msra.mxu0 %v693
        %695 = vmatprep.subr.mxu0 0.0
        %696 = vmatpush1.msra.mxu0 0.0
        %697 = vmatprep.subr.mxu0 0.0
        %698 = vmatpush1.msra.mxu0 0.0
        %699 = vmatprep.subr.mxu0 0.0
        %700 = vmatpush1.msra.mxu0 0.0
        %701 = vmatprep.subr.mxu0 0.0
        %702 = vmatpush1.msra.mxu0 0.0
        %703 = vmatprep.subr.mxu0 0.0
        %704 = vmatpush1.msra.mxu0 0.0
        %705 = vmatprep.subr.mxu0 0.0
        %706 = vmatpush1.msra.mxu0 0.0
        %707 = vmatprep.subr.mxu0 0.0
        %708 = vmatpush1.msra.mxu0 0.0
        %709 = vmatprep.subr.mxu0 0.0
        %710 = vmatpush1.msra.mxu0 0.0
        %711 = vmatprep.subr.mxu0 0.0
        %712 = vmatpush1.msra.mxu0 0.0
        %713 = vmatprep.subr.mxu0 0.0
        %714 = vmatpush1.msra.mxu0 0.0
        %715 = vmatprep.subr.mxu0 0.0
        %716 = vmatpush1.msra.mxu0 0.0
        %717 = vmatprep.subr.mxu0 0.0
        %718 = vmatpush1.msra.mxu0 0.0
        %719 = vmatprep.subr.mxu0 0.0
        %720 = vmatpush1.msra.mxu0 0.0
        %721 = vmatprep.subr.mxu0 0.0
        %722 = vmatpush1.msra.mxu0 0.0
        %723 = vmatprep.subr.mxu0 0.0
        %724 = vmatpush1.msra.mxu0 0.0
        %725 = vmatprep.subr.mxu0 0.0
        %726 = vmatpush1.msra.mxu0 0.0
        %727 = vmatprep.subr.mxu0 0.0
        %728 = vmatpush1.msra.mxu0 0.0
        %729 = vmatprep.subr.mxu0 0.0
        %730 = vmatpush1.msra.mxu0 0.0
        %731 = vmatprep.subr.mxu0 0.0
        %732 = vmatpush1.msra.mxu0 0.0
        %733 = vmatprep.subr.mxu0 0.0
        %734 = vmatpush1.msra.mxu0 0.0
        %735 = vmatprep.subr.mxu0 0.0
        %736 = vmatpush1.msra.mxu0 0.0
        %737 = vmatprep.subr.mxu0 0.0
        %738 = vmatpush1.msra.mxu0 0.0
        %739 = vmatprep.subr.mxu0 0.0
        %740 = vmatpush1.msra.mxu0 0.0
        %741 = vmatprep.subr.mxu0 0.0
        %742 = vmatpush1.msra.mxu0 0.0
        %743 = vmatprep.subr.mxu0 0.0
        %744 = vmatpush1.msra.mxu0 0.0
        %745 = vmatprep.subr.mxu0 0.0
        %746 = vmatpush1.msra.mxu0 0.0
        %747 = vmatprep.subr.mxu0 0.0
        %748 = vmatpush1.msra.mxu0 0.0
        %749 = vmatprep.subr.mxu0 0.0
        %750 = vmatpush1.msra.mxu0 0.0
        %751 = vmatprep.mubr.f32.mxu0 0.0
        %v752 = vand.u32 %v374, 4294901760
        %v753 = vsub.f32 %v374, %v752
        %754 = vmatmul.mubr.f32.gmra.mrb[0].mxu0 %v753
        %v755 = vpop.f32.mrb[0].mxu0
        %v756 = vadd.f32 %v634, %v755
        %v757 = vpop.f32.mrb[0].mxu0
        %758 = vmatprep.mubr.f32.mxu0 0.0
        %v759 = vand.u32 %v377, 4294901760
        %v760 = vsub.f32 %v377, %v759
        %761 = vmatmul.mubr.f32.gmra.mrb[0].mxu0 %v760
        %v762 = vpop.f32.mrb[0].mxu0
        %v763 = vadd.f32 %v640, %v762
        %v764 = vpop.f32.mrb[0].mxu0
        %765 = vmatprep.mubr.f32.mxu0 0.0
        %v766 = vand.u32 %v380, 4294901760
        %v767 = vsub.f32 %v380, %v766
        %768 = vmatmul.mubr.f32.gmra.mrb[0].mxu0 %v767
        %v769 = vpop.f32.mrb[0].mxu0
        %v770 = vadd.f32 %v646, %v769
        %v771 = vpop.f32.mrb[0].mxu0
        %772 = vmatprep.mubr.f32.mxu0 0.0
        %v773 = vand.u32 %v383, 4294901760
        %v774 = vsub.f32 %v383, %v773
        %775 = vmatmul.mubr.f32.gmra.mrb[0].mxu0 %v774
        %v776 = vpop.f32.mrb[0].mxu0
        %v777 = vadd.f32 %v652, %v776
        %v778 = vpop.f32.mrb[0].mxu0
        %779 = vmatprep.mubr.f32.mxu0 0.0
        %v780 = vand.u32 %v386, 4294901760
        %v781 = vsub.f32 %v386, %v780
        %782 = vmatmul.mubr.f32.gmra.mrb[0].mxu0 %v781
        %v783 = vpop.f32.mrb[0].mxu0
        %v784 = vadd.f32 %v658, %v783
        %v785 = vpop.f32.mrb[0].mxu0
        %786 = vmatprep.mubr.f32.mxu0 0.0
        %v787 = vand.u32 %v389, 4294901760
        %v788 = vsub.f32 %v389, %v787
        %789 = vmatmul.mubr.f32.gmra.mrb[0].mxu0 %v788
        %v790 = vpop.f32.mrb[0].mxu0
        %v791 = vadd.f32 %v664, %v790
        %v792 = vpop.f32.mrb[0].mxu0
        %793 = vmatprep.mubr.f32.mxu0 0.0
        %v794 = vand.u32 %v392, 4294901760
        %v795 = vsub.f32 %v392, %v794
        %796 = vmatmul.mubr.f32.gmra.mrb[0].mxu0 %v795
        %v797 = vpop.f32.mrb[0].mxu0
        %v798 = vadd.f32 %v670, %v797
        %v799 = vpop.f32.mrb[0].mxu0
        %800 = vmatprep.mubr.f32.mxu0 0.0
        %v801 = vand.u32 %v395, 4294901760
        %v802 = vsub.f32 %v395, %v801
        %803 = vmatmul.mubr.f32.gmra.mrb[0].mxu0 %v802
        %v804 = vpop.f32.mrb[0].mxu0
        %v805 = vadd.f32 %v676, %v804
        %v806 = vpop.f32.mrb[0].mxu0
        %807 = vdwg.mxu0
        %808 = vmatprep.subr.mxu0 0.0
        %v809 = vand.u32 %v368, 4294901760
        %810 = vmatpush1.msra.mxu0 %v809
        %811 = vmatprep.subr.mxu0 0.0
        %v812 = vand.u32 %v369, 4294901760
        %813 = vmatpush1.msra.mxu0 %v812
        %814 = vmatprep.subr.mxu0 0.0
        %v815 = vand.u32 %v370, 4294901760
        %816 = vmatpush1.msra.mxu0 %v815
        %817 = vmatprep.subr.mxu0 0.0
        %v818 = vand.u32 %v371, 4294901760
        %819 = vmatpush1.msra.mxu0 %v818
        %820 = vmatprep.subr.mxu0 0.0
        %821 = vmatpush1.msra.mxu0 0.0
        %822 = vmatprep.subr.mxu0 0.0
        %823 = vmatpush1.msra.mxu0 0.0
        %824 = vmatprep.subr.mxu0 0.0
        %825 = vmatpush1.msra.mxu0 0.0
        %826 = vmatprep.subr.mxu0 0.0
        %827 = vmatpush1.msra.mxu0 0.0
        %828 = vmatprep.subr.mxu0 0.0
        %829 = vmatpush1.msra.mxu0 0.0
        %830 = vmatprep.subr.mxu0 0.0
        %831 = vmatpush1.msra.mxu0 0.0
        %832 = vmatprep.subr.mxu0 0.0
        %833 = vmatpush1.msra.mxu0 0.0
        %834 = vmatprep.subr.mxu0 0.0
        %835 = vmatpush1.msra.mxu0 0.0
        %836 = vmatprep.subr.mxu0 0.0
        %837 = vmatpush1.msra.mxu0 0.0
        %838 = vmatprep.subr.mxu0 0.0
        %839 = vmatpush1.msra.mxu0 0.0
        %840 = vmatprep.subr.mxu0 0.0
        %841 = vmatpush1.msra.mxu0 0.0
        %842 = vmatprep.subr.mxu0 0.0
        %843 = vmatpush1.msra.mxu0 0.0
        %844 = vmatprep.subr.mxu0 0.0
        %845 = vmatpush1.msra.mxu0 0.0
        %846 = vmatprep.subr.mxu0 0.0
        %847 = vmatpush1.msra.mxu0 0.0
        %848 = vmatprep.subr.mxu0 0.0
        %849 = vmatpush1.msra.mxu0 0.0
        %850 = vmatprep.subr.mxu0 0.0
        %851 = vmatpush1.msra.mxu0 0.0
        %852 = vmatprep.subr.mxu0 0.0
        %853 = vmatpush1.msra.mxu0 0.0
        %854 = vmatprep.subr.mxu0 0.0
        %855 = vmatpush1.msra.mxu0 0.0
        %856 = vmatprep.subr.mxu0 0.0
        %857 = vmatpush1.msra.mxu0 0.0
        %858 = vmatprep.subr.mxu0 0.0
        %859 = vmatpush1.msra.mxu0 0.0
        %860 = vmatprep.subr.mxu0 0.0
        %861 = vmatpush1.msra.mxu0 0.0
        %862 = vmatprep.subr.mxu0 0.0
        %863 = vmatpush1.msra.mxu0 0.0
        %864 = vmatprep.subr.mxu0 0.0
        %865 = vmatpush1.msra.mxu0 0.0
        %866 = vmatprep.subr.mxu0 0.0
        %867 = vmatpush1.msra.mxu0 0.0
        %868 = vmatprep.subr.mxu0 0.0
        %869 = vmatpush1.msra.mxu0 0.0
        %870 = vmatprep.subr.mxu0 0.0
        %871 = vmatpush1.msra.mxu0 0.0
        %872 = vmatprep.subr.mxu0 0.0
        %873 = vmatpush1.msra.mxu0 0.0
        %874 = vmatprep.subr.mxu0 0.0
        %875 = vmatpush1.msra.mxu0 0.0
        %876 = vmatprep.mubr.f32.mxu0 0.0
        %v877 = vand.u32 %v374, 4294901760
        %v878 = vsub.f32 %v374, %v877
        %v879 = vand.u32 %v878, 4294901760
        %880 = vmatmul.mubr.f32.gmra.mrb[0].mxu0 %v879
        %v881 = vpop.f32.mrb[0].mxu0
        %v882 = vadd.f32 %v756, %v881
        %v883 = vpop.f32.mrb[0].mxu0
        %884 = vmatprep.mubr.f32.mxu0 0.0
        %v885 = vand.u32 %v377, 4294901760
        %v886 = vsub.f32 %v377, %v885
        %v887 = vand.u32 %v886, 4294901760
        %888 = vmatmul.mubr.f32.gmra.mrb[0].mxu0 %v887
        %v889 = vpop.f32.mrb[0].mxu0
        %v890 = vadd.f32 %v763, %v889
        %v891 = vpop.f32.mrb[0].mxu0
        %892 = vmatprep.mubr.f32.mxu0 0.0
        %v893 = vand.u32 %v380, 4294901760
        %v894 = vsub.f32 %v380, %v893
        %v895 = vand.u32 %v894, 4294901760
        %896 = vmatmul.mubr.f32.gmra.mrb[0].mxu0 %v895
        %v897 = vpop.f32.mrb[0].mxu0
        %v898 = vadd.f32 %v770, %v897
        %v899 = vpop.f32.mrb[0].mxu0
        %900 = vmatprep.mubr.f32.mxu0 0.0
        %v901 = vand.u32 %v383, 4294901760
        %v902 = vsub.f32 %v383, %v901
        %v903 = vand.u32 %v902, 4294901760
        %904 = vmatmul.mubr.f32.gmra.mrb[0].mxu0 %v903
        %v905 = vpop.f32.mrb[0].mxu0
        %v906 = vadd.f32 %v777, %v905
        %v907 = vpop.f32.mrb[0].mxu0
        %908 = vmatprep.mubr.f32.mxu0 0.0
        %v909 = vand.u32 %v386, 4294901760
        %v910 = vsub.f32 %v386, %v909
        %v911 = vand.u32 %v910, 4294901760
        %912 = vmatmul.mubr.f32.gmra.mrb[0].mxu0 %v911
        %v913 = vpop.f32.mrb[0].mxu0
        %v914 = vadd.f32 %v784, %v913
        %v915 = vpop.f32.mrb[0].mxu0
        %916 = vmatprep.mubr.f32.mxu0 0.0
        %v917 = vand.u32 %v389, 4294901760
        %v918 = vsub.f32 %v389, %v917
        %v919 = vand.u32 %v918, 4294901760
        %920 = vmatmul.mubr.f32.gmra.mrb[0].mxu0 %v919
        %v921 = vpop.f32.mrb[0].mxu0
        %v922 = vadd.f32 %v791, %v921
        %v923 = vpop.f32.mrb[0].mxu0
        %924 = vmatprep.mubr.f32.mxu0 0.0
        %v925 = vand.u32 %v392, 4294901760
        %v926 = vsub.f32 %v392, %v925
        %v927 = vand.u32 %v926, 4294901760
        %928 = vmatmul.mubr.f32.gmra.mrb[0].mxu0 %v927
        %v929 = vpop.f32.mrb[0].mxu0
        %v930 = vadd.f32 %v798, %v929
        %v931 = vpop.f32.mrb[0].mxu0
        %932 = vmatprep.mubr.f32.mxu0 0.0
        %v933 = vand.u32 %v395, 4294901760
        %v934 = vsub.f32 %v395, %v933
        %v935 = vand.u32 %v934, 4294901760
        %936 = vmatmul.mubr.f32.gmra.mrb[0].mxu0 %v935
        %v937 = vpop.f32.mrb[0].mxu0
        %v938 = vadd.f32 %v805, %v937
        %v939 = vpop.f32.mrb[0].mxu0
        %940 = vdwg.mxu0
        %941 = vmatprep.subr.mxu0 0.0
        %v942 = vand.u32 %v368, 4294901760
        %v943 = vsub.f32 %v368, %v942
        %v944 = vand.u32 %v943, 4294901760
        %945 = vmatpush1.msra.mxu0 %v944
        %946 = vmatprep.subr.mxu0 0.0
        %v947 = vand.u32 %v369, 4294901760
        %v948 = vsub.f32 %v369, %v947
        %v949 = vand.u32 %v948, 4294901760
        %950 = vmatpush1.msra.mxu0 %v949
        %951 = vmatprep.subr.mxu0 0.0
        %v952 = vand.u32 %v370, 4294901760
        %v953 = vsub.f32 %v370, %v952
        %v954 = vand.u32 %v953, 4294901760
        %955 = vmatpush1.msra.mxu0 %v954
        %956 = vmatprep.subr.mxu0 0.0
        %v957 = vand.u32 %v371, 4294901760
        %v958 = vsub.f32 %v371, %v957
        %v959 = vand.u32 %v958, 4294901760
        %960 = vmatpush1.msra.mxu0 %v959
        %961 = vmatprep.subr.mxu0 0.0
        %962 = vmatpush1.msra.mxu0 0.0
        %963 = vmatprep.subr.mxu0 0.0
        %964 = vmatpush1.msra.mxu0 0.0
        %965 = vmatprep.subr.mxu0 0.0
        %966 = vmatpush1.msra.mxu0 0.0
        %967 = vmatprep.subr.mxu0 0.0
        %968 = vmatpush1.msra.mxu0 0.0
        %969 = vmatprep.subr.mxu0 0.0
        %970 = vmatpush1.msra.mxu0 0.0
        %971 = vmatprep.subr.mxu0 0.0
        %972 = vmatpush1.msra.mxu0 0.0
        %973 = vmatprep.subr.mxu0 0.0
        %974 = vmatpush1.msra.mxu0 0.0
        %975 = vmatprep.subr.mxu0 0.0
        %976 = vmatpush1.msra.mxu0 0.0
        %977 = vmatprep.subr.mxu0 0.0
        %978 = vmatpush1.msra.mxu0 0.0
        %979 = vmatprep.subr.mxu0 0.0
        %980 = vmatpush1.msra.mxu0 0.0
        %981 = vmatprep.subr.mxu0 0.0
        %982 = vmatpush1.msra.mxu0 0.0
        %983 = vmatprep.subr.mxu0 0.0
        %984 = vmatpush1.msra.mxu0 0.0
        %985 = vmatprep.subr.mxu0 0.0
        %986 = vmatpush1.msra.mxu0 0.0
        %987 = vmatprep.subr.mxu0 0.0
        %988 = vmatpush1.msra.mxu0 0.0
        %989 = vmatprep.subr.mxu0 0.0
        %990 = vmatpush1.msra.mxu0 0.0
        %991 = vmatprep.subr.mxu0 0.0
        %992 = vmatpush1.msra.mxu0 0.0
        %993 = vmatprep.subr.mxu0 0.0
        %994 = vmatpush1.msra.mxu0 0.0
        %995 = vmatprep.subr.mxu0 0.0
        %996 = vmatpush1.msra.mxu0 0.0
        %997 = vmatprep.subr.mxu0 0.0
        %998 = vmatpush1.msra.mxu0 0.0
        %999 = vmatprep.subr.mxu0 0.0
        %1000 = vmatpush1.msra.mxu0 0.0
        %1001 = vmatprep.subr.mxu0 0.0
        %1002 = vmatpush1.msra.mxu0 0.0
        %1003 = vmatprep.subr.mxu0 0.0
        %1004 = vmatpush1.msra.mxu0 0.0
        %1005 = vmatprep.subr.mxu0 0.0
        %1006 = vmatpush1.msra.mxu0 0.0
        %1007 = vmatprep.subr.mxu0 0.0
        %1008 = vmatpush1.msra.mxu0 0.0
        %1009 = vmatprep.subr.mxu0 0.0
        %1010 = vmatpush1.msra.mxu0 0.0
        %1011 = vmatprep.subr.mxu0 0.0
        %1012 = vmatpush1.msra.mxu0 0.0
        %1013 = vmatprep.subr.mxu0 0.0
        %1014 = vmatpush1.msra.mxu0 0.0
        %1015 = vmatprep.subr.mxu0 0.0
        %1016 = vmatpush1.msra.mxu0 0.0
        %1017 = vmatprep.mubr.f32.mxu0 0.0
        %v1018 = vand.u32 %v374, 4294901760
        %1019 = vmatmul.mubr.f32.gmra.mrb[0].mxu0 %v1018
        %v1020 = vpop.f32.mrb[0].mxu0
        %v1021 = vadd.f32 %v882, %v1020
        %v1022 = vpop.f32.mrb[0].mxu0
        %1023 = vmatprep.mubr.f32.mxu0 0.0
        %v1024 = vand.u32 %v377, 4294901760
        %1025 = vmatmul.mubr.f32.gmra.mrb[0].mxu0 %v1024
        %v1026 = vpop.f32.mrb[0].mxu0
        %v1027 = vadd.f32 %v890, %v1026
        %v1028 = vpop.f32.mrb[0].mxu0
        %1029 = vmatprep.mubr.f32.mxu0 0.0
        %v1030 = vand.u32 %v380, 4294901760
        %1031 = vmatmul.mubr.f32.gmra.mrb[0].mxu0 %v1030
        %v1032 = vpop.f32.mrb[0].mxu0
        %v1033 = vadd.f32 %v898, %v1032
        %v1034 = vpop.f32.mrb[0].mxu0
        %1035 = vmatprep.mubr.f32.mxu0 0.0
        %v1036 = vand.u32 %v383, 4294901760
        %1037 = vmatmul.mubr.f32.gmra.mrb[0].mxu0 %v1036
        %v1038 = vpop.f32.mrb[0].mxu0
        %v1039 = vadd.f32 %v906, %v1038
        %v1040 = vpop.f32.mrb[0].mxu0
        %1041 = vmatprep.mubr.f32.mxu0 0.0
        %v1042 = vand.u32 %v386, 4294901760
        %1043 = vmatmul.mubr.f32.gmra.mrb[0].mxu0 %v1042
        %v1044 = vpop.f32.mrb[0].mxu0
        %v1045 = vadd.f32 %v914, %v1044
        %v1046 = vpop.f32.mrb[0].mxu0
        %1047 = vmatprep.mubr.f32.mxu0 0.0
        %v1048 = vand.u32 %v389, 4294901760
        %1049 = vmatmul.mubr.f32.gmra.mrb[0].mxu0 %v1048
        %v1050 = vpop.f32.mrb[0].mxu0
        %v1051 = vadd.f32 %v922, %v1050
        %v1052 = vpop.f32.mrb[0].mxu0
        %1053 = vmatprep.mubr.f32.mxu0 0.0
        %v1054 = vand.u32 %v392, 4294901760
        %1055 = vmatmul.mubr.f32.gmra.mrb[0].mxu0 %v1054
        %v1056 = vpop.f32.mrb[0].mxu0
        %v1057 = vadd.f32 %v930, %v1056
        %v1058 = vpop.f32.mrb[0].mxu0
        %1059 = vmatprep.mubr.f32.mxu0 0.0
        %v1060 = vand.u32 %v395, 4294901760
        %1061 = vmatmul.mubr.f32.gmra.mrb[0].mxu0 %v1060
        %v1062 = vpop.f32.mrb[0].mxu0
        %v1063 = vadd.f32 %v938, %v1062
        %v1064 = vpop.f32.mrb[0].mxu0
        %1065 = vdwg.mxu0
        %1066 = vmatprep.subr.mxu0 0.0
        %v1067 = vand.u32 %v368, 4294901760
        %1068 = vmatpush1.msra.mxu0 %v1067
        %1069 = vmatprep.subr.mxu0 0.0
        %v1070 = vand.u32 %v369, 4294901760
        %1071 = vmatpush1.msra.mxu0 %v1070
        %1072 = vmatprep.subr.mxu0 0.0
        %v1073 = vand.u32 %v370, 4294901760
        %1074 = vmatpush1.msra.mxu0 %v1073
        %1075 = vmatprep.subr.mxu0 0.0
        %v1076 = vand.u32 %v371, 4294901760
        %1077 = vmatpush1.msra.mxu0 %v1076
        %1078 = vmatprep.subr.mxu0 0.0
        %1079 = vmatpush1.msra.mxu0 0.0
        %1080 = vmatprep.subr.mxu0 0.0
        %1081 = vmatpush1.msra.mxu0 0.0
        %1082 = vmatprep.subr.mxu0 0.0
        %1083 = vmatpush1.msra.mxu0 0.0
        %1084 = vmatprep.subr.mxu0 0.0
        %1085 = vmatpush1.msra.mxu0 0.0
        %1086 = vmatprep.subr.mxu0 0.0
        %1087 = vmatpush1.msra.mxu0 0.0
        %1088 = vmatprep.subr.mxu0 0.0
        %1089 = vmatpush1.msra.mxu0 0.0
        %1090 = vmatprep.subr.mxu0 0.0
        %1091 = vmatpush1.msra.mxu0 0.0
        %1092 = vmatprep.subr.mxu0 0.0
        %1093 = vmatpush1.msra.mxu0 0.0
        %1094 = vmatprep.subr.mxu0 0.0
        %1095 = vmatpush1.msra.mxu0 0.0
        %1096 = vmatprep.subr.mxu0 0.0
        %1097 = vmatpush1.msra.mxu0 0.0
        %1098 = vmatprep.subr.mxu0 0.0
        %1099 = vmatpush1.msra.mxu0 0.0
        %1100 = vmatprep.subr.mxu0 0.0
        %1101 = vmatpush1.msra.mxu0 0.0
        %1102 = vmatprep.subr.mxu0 0.0
        %1103 = vmatpush1.msra.mxu0 0.0
        %1104 = vmatprep.subr.mxu0 0.0
        %1105 = vmatpush1.msra.mxu0 0.0
        %1106 = vmatprep.subr.mxu0 0.0
        %1107 = vmatpush1.msra.mxu0 0.0
        %1108 = vmatprep.subr.mxu0 0.0
        %1109 = vmatpush1.msra.mxu0 0.0
        %1110 = vmatprep.subr.mxu0 0.0
        %1111 = vmatpush1.msra.mxu0 0.0
        %1112 = vmatprep.subr.mxu0 0.0
        %1113 = vmatpush1.msra.mxu0 0.0
        %1114 = vmatprep.subr.mxu0 0.0
        %1115 = vmatpush1.msra.mxu0 0.0
        %1116 = vmatprep.subr.mxu0 0.0
        %1117 = vmatpush1.msra.mxu0 0.0
        %1118 = vmatprep.subr.mxu0 0.0
        %1119 = vmatpush1.msra.mxu0 0.0
        %1120 = vmatprep.subr.mxu0 0.0
        %1121 = vmatpush1.msra.mxu0 0.0
        %1122 = vmatprep.subr.mxu0 0.0
        %1123 = vmatpush1.msra.mxu0 0.0
        %1124 = vmatprep.subr.mxu0 0.0
        %1125 = vmatpush1.msra.mxu0 0.0
        %1126 = vmatprep.subr.mxu0 0.0
        %1127 = vmatpush1.msra.mxu0 0.0
        %1128 = vmatprep.subr.mxu0 0.0
        %1129 = vmatpush1.msra.mxu0 0.0
        %1130 = vmatprep.subr.mxu0 0.0
        %1131 = vmatpush1.msra.mxu0 0.0
        %1132 = vmatprep.subr.mxu0 0.0
        %1133 = vmatpush1.msra.mxu0 0.0
        %1134 = vmatprep.mubr.f32.mxu0 0.0
        %v1135 = vand.u32 %v374, 4294901760
        %1136 = vmatmul.mubr.f32.gmra.mrb[0].mxu0 %v1135
        %v1137 = vpop.f32.mrb[0].mxu0
        %v1138 = vadd.f32 %v1021, %v1137
        %v1139 = vpop.f32.mrb[0].mxu0
        %1140 = vmatprep.mubr.f32.mxu0 0.0
        %v1141 = vand.u32 %v377, 4294901760
        %1142 = vmatmul.mubr.f32.gmra.mrb[0].mxu0 %v1141
        %v1143 = vpop.f32.mrb[0].mxu0
        %v1144 = vadd.f32 %v1027, %v1143
        %v1145 = vpop.f32.mrb[0].mxu0
        %1146 = vmatprep.mubr.f32.mxu0 0.0
        %v1147 = vand.u32 %v380, 4294901760
        %1148 = vmatmul.mubr.f32.gmra.mrb[0].mxu0 %v1147
        %v1149 = vpop.f32.mrb[0].mxu0
        %v1150 = vadd.f32 %v1033, %v1149
        %v1151 = vpop.f32.mrb[0].mxu0
        %1152 = vmatprep.mubr.f32.mxu0 0.0
        %v1153 = vand.u32 %v383, 4294901760
        %1154 = vmatmul.mubr.f32.gmra.mrb[0].mxu0 %v1153
        %v1155 = vpop.f32.mrb[0].mxu0
        %v1156 = vadd.f32 %v1039, %v1155
        %v1157 = vpop.f32.mrb[0].mxu0
        %1158 = vmatprep.mubr.f32.mxu0 0.0
        %v1159 = vand.u32 %v386, 4294901760
        %1160 = vmatmul.mubr.f32.gmra.mrb[0].mxu0 %v1159
        %v1161 = vpop.f32.mrb[0].mxu0
        %v1162 = vadd.f32 %v1045, %v1161
        %v1163 = vpop.f32.mrb[0].mxu0
        %1164 = vmatprep.mubr.f32.mxu0 0.0
        %v1165 = vand.u32 %v389, 4294901760
        %1166 = vmatmul.mubr.f32.gmra.mrb[0].mxu0 %v1165
        %v1167 = vpop.f32.mrb[0].mxu0
        %v1168 = vadd.f32 %v1051, %v1167
        %v1169 = vpop.f32.mrb[0].mxu0
        %1170 = vmatprep.mubr.f32.mxu0 0.0
        %v1171 = vand.u32 %v392, 4294901760
        %1172 = vmatmul.mubr.f32.gmra.mrb[0].mxu0 %v1171
        %v1173 = vpop.f32.mrb[0].mxu0
        %v1174 = vadd.f32 %v1057, %v1173
        %v1175 = vpop.f32.mrb[0].mxu0
        %1176 = vmatprep.mubr.f32.mxu0 0.0
        %v1177 = vand.u32 %v395, 4294901760
        %1178 = vmatmul.mubr.f32.gmra.mrb[0].mxu0 %v1177
        %v1179 = vpop.f32.mrb[0].mxu0
        %v1180 = vadd.f32 %v1063, %v1179
        %v1181 = vpop.f32.mrb[0].mxu0
        %1182 = vdwg.mxu0
        %1183 = vst.msk [vmem:[%s207] sm:$0xff] %vm372, %v1138
        %1184 = vst.msk [vmem:[%s207 + $0x8] sm:$0xff] %vm372, %v1144
        %1185 = vst.msk [vmem:[%s207 + $0x10] sm:$0xff] %vm372, %v1150
        %1186 = vst.msk [vmem:[%s207 + $0x18] sm:$0xff] %vm372, %v1156
        %1187 = vst.msk [vmem:[%s207 + $0x20] sm:$0xff] %vm372, %v1162
        %1188 = vst.msk [vmem:[%s207 + $0x28] sm:$0xff] %vm372, %v1168
        %1189 = vst.msk [vmem:[%s207 + $0x30] sm:$0xff] %vm372, %v1174
        %1190 = vst.msk [vmem:[%s207 + $0x38] sm:$0xff] %vm372, %v1180
        %s1191 = sand.u32 %s102, 1
        %s1192 = scalar_lea.sflag [#allocation4], %s1191
        %s1193 = sand.u32 %s102, 1
        %s1194 = smul.addr %s1193, 64
        %s1195 = scalar_lea.vmem [#allocation7], %s1194
        // Predicated region
        $region37: #{tpu_custom_call.1} parent=27 // pred_check
          %p1196 = pneg %p112
        $region38: #{tpu_custom_call.1} parent=27 // pred_check_branch
          %1198 = sbr.rel (%p1196) target = $region40
        $region39: #{tpu_custom_call.1} parent=27 // pred_region
          %s1199 = smul.u32 8, %s27
          %s1201 = ssub.s32 1024, 1024
          %1202 = vsyncadd %s1192, %s1201
          %s1203 = smul.addr %s1199, 2
          %s1204 = sadd.s32 %s26, %s1203
          %s1205 = smul.addr %s25, 16
          %s1206 = sadd.s32 %s1204, %s1205
          %s1207 = smul.addr %s1206, 128
          %s1208 = scalar_lea.hbm %s2, %s1207
          %s1209 = sshll.u32 %s1195, 4
          %s1210 = int_to_ptr.vmem [resolvable:$true] %s1209
          %1215 = dma.vmem_to_hbm [thread:$0]  %s1210, 1024, %s1208, %s1192, 128, 256, 8
        $region40: #{tpu_custom_call.1} parent=27 // pred_fallthru
          _
      $region28: #{tpu_custom_call.1} parent=5 // pred_fallthru
        _
      %p1216 = scmp.le.s32.totalorder 2, %s15
      // Predicated region
      $region41: #{tpu_custom_call.1} parent=5 // pred_check
        %p1217 = pneg %p1216
      $region42: #{tpu_custom_call.1} parent=5 // pred_check_branch
        %1219 = sbr.rel (%p1217) target = $region44
      $region43: #{tpu_custom_call.1} parent=5 // pred_region
        %s1220 = ssub.s32 %s15, 2
        // Predicated region
        $region45: #{tpu_custom_call.1} parent=43 // pred_check
          %p1221 = pneg %p118
        $region46: #{tpu_custom_call.1} parent=43 // pred_check_branch
          %1223 = sbr.rel (%p1221) target = $region48
        $region47: #{tpu_custom_call.1} parent=43 // pred_region
          %s1224 = sand.u32 %s103, 1
          %s1225 = scalar_lea.sflag [#allocation4], %s1224
          %s1226 = sand.u32 %s103, 1
          %s1227 = smul.addr %s1226, 64
          %s1228 = scalar_lea.vmem [#allocation7], %s1227
          %1229 = dma.done %s1225, 1024
        $region48: #{tpu_custom_call.1} parent=43 // pred_fallthru
          _
      $region44: #{tpu_custom_call.1} parent=5 // pred_fallthru
        _
    $region6: #{tpu_custom_call.1} parent=1 // loop_footer
      %s19 = sadd.s32 1, %s15
    $region7: #{tpu_custom_call.1} parent=1 // loop_footer_branch
      %14 = sbr.rel target = $region3
    $region8: #{tpu_custom_call.1} parent=1 // loop_exit
      _
    %1230 = vsyncpa [#allocation3], 1
    %s1231 = scalar_lea.sflag [#allocation3], 1
    %1232 = vsyncpa %s1231, 1
    %1233 = vsyncpa [#allocation6], 1
    %1234 = vsyncpa [#allocation4], 1
    %s1235 = scalar_lea.sflag [#allocation4], 1
    %1236 = vsyncpa %s1235, 1

</llo_original>
